<compile_context>
chip_gen: v5e
topology: v5e:2x2
jax: 0.10.0
libtpu: 0.0.40
codegen_flags: <defaults>
</compile_context>

<pallas_src>
import jax
import jax.numpy as jnp
from jax.experimental import pallas as pl
from jax.experimental.pallas import tpu as pltpu

HIDDEN = 100          # fc1 out_features (PyTorch)
HPAD = 128            # hidden padded to one full vreg lane width
OUT = 1               # fc4 out_features
LANE = 128            # TPU lane width
TB_MAX = 8192         # hard cap on batch tile rows (multiple of 1024)
VMEM_BUDGET = 24 * 1024 * 1024   # target bytes for pipeline buffers + intermediates
VMEM_LIMIT = 32 * 1024 * 1024    # explicit scoped-VMEM limit (v5e default is only 16 MiB)


def _round_up(n, m):
    return (n + m - 1) // m * m


def _choose_tile(b_pad, d):
    """Pick the batch tile (rows). b_pad is a multiple of 128."""
    if b_pad <= 1024:
        # Single tile: block dims equal full array dims, so any multiple of 128 is legal.
        return b_pad, 1
    # Per-row VMEM cost (bytes): x double-buffer (8*D) + h/hw intermediates (~1024)
    # + lane-dense out double-buffer (8) + slack.
    per_row = 8 * d + 1536
    tb_cap = max(1024, min(TB_MAX, (VMEM_BUDGET // per_row) // 1024 * 1024))
    # Keep at least 2 grid steps so the v7x megacore 'parallel' axis has work for both
    # TensorCores; tiles are multiples of 1024 rows so the output block's second-to-last
    # dim (tb/128) stays a multiple of 8.
    half = _round_up(pl.cdiv(b_pad, 2), 1024)
    tb = min(tb_cap, half)
    return tb, pl.cdiv(b_pad, tb)


def mlp_kernel(x_ref, w1_ref, b1_ref, w4_ref, b4_ref, o_ref):
    # Per grid step:
    #   x_ref : (TB, D)        w1_ref: (D, HPAD)     b1_ref: (1, HPAD)
    #   w4_ref: (1, HPAD)      b4_ref: (1,) in SMEM  o_ref : (TB//128, 128)
    # fc1 on the MXU, f32 accumulation.
    h = jnp.dot(x_ref[...], w1_ref[...], preferred_element_type=jnp.float32)
    h = jnp.maximum(h + b1_ref[...], 0.0)                      # bias + ReLU (VPU)

    # fc4 (out_features = 1): VPU multiply + lane reduction instead of an N=1 MXU matmul.
    hw = h * w4_ref[...]                                       # (TB, HPAD)
    rows, lanes = o_ref.shape                                  # (TB//128, 128)
    # Leading-dim split (layout-preserving), then reduce the hidden (lane) dim on the XLU.
    # TODO(synk): confirm in the lowered MLIR that this reshape+sum does not materialize
    # a VMEM copy; if it does, switch to an explicit pltpu.roll reduction tree.
    y = jnp.sum(hw.reshape(rows, lanes, HPAD), axis=-1)        # (TB//128, 128) lane-dense
    o_ref[...] = y + b4_ref[0]                                 # scalar bias from SMEM


def mlp_forward(x, w1_t, b1_row, w4_row, b4_s):
    """x: (B, D) f32.  Params in kernel layout (see prepare_params).  Returns (B, 1)."""
    B, D = x.shape

    # Pad the batch only to a multiple of 128 (cheap; <= 127 zero rows).  The grid uses
    # cdiv + a partial last tile instead of padding x up to a multiple of the tile.
    b_pad = max(LANE, _round_up(B, LANE))
    x_p = x if b_pad == B else jnp.pad(x, ((0, b_pad - B), (0, 0)))

    tb, grid_b = _choose_tile(b_pad, D)
    rows = tb // LANE                                          # output slab rows per tile

    flops = 2 * b_pad * D * HPAD + 3 * b_pad * HPAD
    bytes_accessed = 4 * (b_pad * D + D * HPAD + 2 * HPAD + 1 + b_pad)

    out = pl.pallas_call(
        mlp_kernel,
        out_shape=jax.ShapeDtypeStruct((b_pad // LANE, LANE), jnp.float32),
        grid=(grid_b,),
        in_specs=[
            pl.BlockSpec((tb, D), lambda i: (i, 0)),           # x: streamed per tile
            pl.BlockSpec((D, HPAD), lambda i: (0, 0)),         # w1: resident in VMEM
            pl.BlockSpec((1, HPAD), lambda i: (0, 0)),         # b1: resident in VMEM
            pl.BlockSpec((1, HPAD), lambda i: (0, 0)),         # w4 row: resident in VMEM
            pl.BlockSpec(memory_space=pltpu.MemorySpace.SMEM), # b4 scalar in SMEM
        ],
        out_specs=pl.BlockSpec((rows, LANE), lambda i: (i, 0)),
        compiler_params=pltpu.CompilerParams(
            dimension_semantics=("parallel",),
            vmem_limit_bytes=VMEM_LIMIT),
        cost_estimate=pl.CostEstimate(
            flops=flops, transcendentals=0, bytes_accessed=bytes_accessed),
    )(x_p, w1_t, b1_row, w4_row, b4_s)

    # Lane-dense (b_pad/128, 128) slab -> caller-facing (B, 1).
    return out.reshape(-1)[:B].reshape(B, OUT)


def init_params(key, input_dim):
    """PyTorch-nn.Linear-shaped params: W1 (100, D), b1 (100,), W4 (1, 100), b4 (1,)."""
    k1, k2, k3, k4 = jax.random.split(key, 4)
    bd1 = 1.0 / float(input_dim) ** 0.5
    bd4 = 1.0 / float(HIDDEN) ** 0.5
    W1 = jax.random.uniform(k1, (HIDDEN, input_dim), jnp.float32, -bd1, bd1)
    b1 = jax.random.uniform(k2, (HIDDEN,), jnp.float32, -bd1, bd1)
    W4 = jax.random.uniform(k3, (OUT, HIDDEN), jnp.float32, -bd4, bd4)
    b4 = jax.random.uniform(k4, (OUT,), jnp.float32, -bd4, bd4)
    return W1, b1, W4, b4


def prepare_params(W1, b1, W4, b4):
    """Transpose + zero-pad to kernel layout.  Padded lanes MUST be zero so the padded
    hidden units stay exactly 0 after ReLU and contribute nothing through w4."""
    D = W1.shape[1]
    w1_t = jnp.zeros((D, HPAD), jnp.float32).at[:, :HIDDEN].set(W1.T)
    b1_row = jnp.zeros((1, HPAD), jnp.float32).at[:, :HIDDEN].set(b1)
    w4_row = jnp.zeros((1, HPAD), jnp.float32).at[:, :HIDDEN].set(W4.reshape(HIDDEN))
    b4_s = jnp.asarray(b4, jnp.float32).reshape((1,))
    return w1_t, b1_row, w4_row, b4_s


if __name__ == "__main__":
    key = jax.random.PRNGKey(0)
    kx, kp, kx2 = jax.random.split(key, 3)

    input_dim = 32
    W1, b1, W4, b4 = init_params(kp, input_dim)
    w1_t, b1_row, w4_row, b4_s = prepare_params(W1, b1, W4, b4)

    def ref_forward(x):  # plain-JAX reference of the PyTorch forward
        h = jnp.maximum(x @ W1.T + b1, 0.0)
        return h @ W4.T + b4

    # Small-batch check (single tile, like typical predict() calls).
    x_small = jax.random.normal(kx, (8, input_dim), jnp.float32)
    out_small = mlp_forward(x_small, w1_t, b1_row, w4_row, b4_s)
    jax.block_until_ready(out_small)
    assert out_small.shape == (8, OUT)
    assert jnp.allclose(out_small, ref_forward(x_small), atol=1e-4, rtol=1e-4)

    # Larger, non-aligned batch exercising the 128-row pad + multi-tile parallel grid
    # with a partial last tile (2500 -> b_pad 2560, tb 2048, grid 2).
    x_big = jax.random.normal(kx2, (2500, input_dim), jnp.float32)
    out_big = mlp_forward(x_big, w1_t, b1_row, w4_row, b4_s)
    jax.block_until_ready(out_big)
    assert out_big.shape == (2500, OUT)
    assert jnp.allclose(out_big, ref_forward(x_big), atol=1e-4, rtol=1e-4)

    print("KERNEL_OK")
</pallas_src>

<mosaic_0001>
module attributes {stable_mosaic.version = 11 : i64} {
  func.func @mlp_kernel(%arg0: i32, %arg1: memref<128x32xf32, #tpu.memory_space<vmem>>, %arg2: memref<32x128xf32, #tpu.memory_space<vmem>>, %arg3: memref<1x128xf32, #tpu.memory_space<vmem>>, %arg4: memref<1x128xf32, #tpu.memory_space<vmem>>, %arg5: memref<1xf32, #tpu.memory_space<smem>>, %arg6: memref<1x128xf32, #tpu.memory_space<vmem>>) attributes {dimension_semantics = [#tpu.dimension_semantics<parallel>], iteration_bounds = array<i64: 1>, scalar_prefetch = 0 : i64, scratch_operands = 0 : i64, tpu.core_type = #tpu.core_type<tc>, window_params = [{transform_indices = @transform_0, window_bounds = array<i64: 128, 32>}, {pipeline_mode = #tpu.pipeline_mode<synchronous>, transform_indices = @transform_1, window_bounds = array<i64: 32, 128>}, {pipeline_mode = #tpu.pipeline_mode<synchronous>, transform_indices = @transform_2, window_bounds = array<i64: 1, 128>}, {pipeline_mode = #tpu.pipeline_mode<synchronous>, transform_indices = @transform_3, window_bounds = array<i64: 1, 128>}, {transform_indices = @transform_4, window_bounds = array<i64: 1>}, {transform_indices = @transform_5, window_bounds = array<i64: 1, 128>}]} {
    %c0 = arith.constant 0 : index
    %c0_0 = arith.constant 0 : index
    %0 = vector.load %arg1[%c0, %c0_0] : memref<128x32xf32, #tpu.memory_space<vmem>>, vector<128x32xf32>
    %c0_1 = arith.constant 0 : index
    %c0_2 = arith.constant 0 : index
    %1 = vector.load %arg2[%c0_1, %c0_2] : memref<32x128xf32, #tpu.memory_space<vmem>>, vector<32x128xf32>
    %cst = arith.constant dense<0.000000e+00> : vector<128x128xf32>
    %2 = tpu.matmul %0, %1, %cst {dimension_numbers = #tpu.dot_dimension_numbers<[1], [0], [0], [1], [0, 0, 1, 1], [], []>} : vector<128x32xf32>, vector<32x128xf32>, vector<128x128xf32> -> vector<128x128xf32>
    %c0_3 = arith.constant 0 : index
    %c0_4 = arith.constant 0 : index
    %3 = vector.load %arg3[%c0_3, %c0_4] : memref<1x128xf32, #tpu.memory_space<vmem>>, vector<1x128xf32>
    %4 = vector.broadcast %3 : vector<1x128xf32> to vector<128x128xf32>
    %5 = arith.addf %2, %4 : vector<128x128xf32>
    %cst_5 = arith.constant 0.000000e+00 : f32
    %6 = vector.broadcast %cst_5 : f32 to vector<128x128xf32>
    %7 = arith.maximumf %5, %6 : vector<128x128xf32>
    %c0_6 = arith.constant 0 : index
    %c0_7 = arith.constant 0 : index
    %8 = vector.load %arg4[%c0_6, %c0_7] : memref<1x128xf32, #tpu.memory_space<vmem>>, vector<1x128xf32>
    %9 = vector.broadcast %8 : vector<1x128xf32> to vector<128x128xf32>
    %10 = arith.mulf %7, %9 : vector<128x128xf32>
    %11 = vector.shape_cast %10 : vector<128x128xf32> to vector<1x128x128xf32>
    %cst_8 = arith.constant dense<0.000000e+00> : vector<1x128xf32>
    %12 = vector.multi_reduction <add>, %11, %cst_8 [2] : vector<1x128x128xf32> to vector<1x128xf32>
    %c0_9 = arith.constant 0 : index
    %13 = memref.load %arg5[%c0_9] : memref<1xf32, #tpu.memory_space<smem>>
    %14 = vector.broadcast %13 : f32 to vector<1x128xf32>
    %15 = arith.addf %12, %14 : vector<1x128xf32>
    %c0_10 = arith.constant 0 : index
    %c0_11 = arith.constant 0 : index
    %16 = vector.load %arg6[%c0_10, %c0_11] : memref<1x128xf32, #tpu.memory_space<vmem>>, vector<1x128xf32>
    tpu.vector_store %arg6[%c0_10, %c0_11], %15 {strides = array<i32>} : memref<1x128xf32, #tpu.memory_space<vmem>>, vector<1x128xf32>,
    return
  }
  func.func @transform_0(%arg0: i32) -> (i32, i32) {
    %c0_i32 = arith.constant 0 : i32
    %c0_i32_0 = arith.constant 0 : i32
    return %arg0, %c0_i32 : i32, i32
  }
  func.func @transform_1(%arg0: i32) -> (i32, i32) {
    %c0_i32 = arith.constant 0 : i32
    %c0_i32_0 = arith.constant 0 : i32
    %c0_i32_1 = arith.constant 0 : i32
    return %c0_i32, %c0_i32_0 : i32, i32
  }
  func.func @transform_2(%arg0: i32) -> (i32, i32) {
    %c0_i32 = arith.constant 0 : i32
    %c0_i32_0 = arith.constant 0 : i32
    %c0_i32_1 = arith.constant 0 : i32
    return %c0_i32, %c0_i32_0 : i32, i32
  }
  func.func @transform_3(%arg0: i32) -> (i32, i32) {
    %c0_i32 = arith.constant 0 : i32
    %c0_i32_0 = arith.constant 0 : i32
    %c0_i32_1 = arith.constant 0 : i32
    return %c0_i32, %c0_i32_0 : i32, i32
  }
  func.func @transform_4(%arg0: i32) -> i32 {
    %c0_i32 = arith.constant 0 : i32
    %c0_i32_0 = arith.constant 0 : i32
    return %c0_i32 : i32
  }
  func.func @transform_5(%arg0: i32) -> (i32, i32) {
    %c0_i32 = arith.constant 0 : i32
    %c0_i32_0 = arith.constant 0 : i32
    return %arg0, %c0_i32 : i32, i32
  }
}

</mosaic_0001>

<llo_original>
// kernel: tpu_custom_call.1
$region0: #{tpu_custom_call.1}
  #allocation0 [shape = 'u32[]', space=smem, size = 0x4, offset = 0x4, fixed_abs, tag = 'smem constant byte address 0x4 - core index']
  #allocation1 [shape = 'u32[72,128]{1,0:T(1,128)}', space=vmem, size = 0x9000, scoped, tag = 'internal scratch']
  #allocation2 [shape = 'f32[1]{0:T(128)S(6)}', space=smem, size = 0x200, scoped, tag = 'scoped memory for tpu_custom_call.1']
  %s0 = inlined_call_operand.vmem [shape: f32[128,32], index: 0, kind: input, shape index: {}]
  %s1 = inlined_call_operand.vmem [shape: f32[32,128], index: 1, kind: input, shape index: {}]
  %s2 = inlined_call_operand.vmem [shape: f32[1,128], index: 2, kind: input, shape index: {}]
  %s3 = inlined_call_operand.vmem [shape: f32[1,128], index: 3, kind: input, shape index: {}]
  %s4 = inlined_call_operand.<no memory space> [shape: f32[1], index: 4, kind: input, shape index: {}]
  %s5 = inlined_call_operand.hbm [shape: f32[1,128], index: 5, kind: output, shape index: {}]
  %s6 = sld [smem:[#allocation0]]
  $region30: #{tpu_custom_call.1} parent=0
    _
  %s8 = ssub.s32 1, %s6
  %s9 = scalar_select 0, %s8, %s6
  %10 = sst [smem:[#allocation2]] %s4
  $region1: #{tpu_custom_call.1} parent=0
    #allocation3 [shape = 'u8[512]{0}', space=vmem, size = 0x400, scoped, tag = 'output window, operand 0, single buffered']
    #allocation4 [shape = 's32[1]{0}', space=sflag, size = 0x4, scoped, tag = 'scoped memory for tpu_custom_call.1']
    %11 = vsyncpa [#allocation4], 0
    // Predicated region
    $region2: #{tpu_custom_call.1} parent=1 // pred_check
      _
    $region3: #{tpu_custom_call.1} parent=1 // pred_check_branch
      %13 = sbr.rel (0) target = $region5
    $region4: #{tpu_custom_call.1} parent=1 // pred_region
      _
    $region5: #{tpu_custom_call.1} parent=1 // pred_fallthru
      _
    // Predicated region
    $region6: #{tpu_custom_call.1} parent=1 // pred_check
      _
    $region7: #{tpu_custom_call.1} parent=1 // pred_check_branch
      %15 = sbr.rel (0) target = $region9
    $region8: #{tpu_custom_call.1} parent=1 // pred_region
      _
    $region9: #{tpu_custom_call.1} parent=1 // pred_fallthru
      _
    // Predicated region
    $region10: #{tpu_custom_call.1} parent=1 // pred_check
      _
    $region11: #{tpu_custom_call.1} parent=1 // pred_check_branch
      %17 = sbr.rel (0) target = $region13
    $region12: #{tpu_custom_call.1} parent=1 // pred_region
      _
    $region13: #{tpu_custom_call.1} parent=1 // pred_fallthru
      _
    // Predicated region
    $region14: #{tpu_custom_call.1} parent=1 // pred_check
      _
    $region15: #{tpu_custom_call.1} parent=1 // pred_check_branch
      %19 = sbr.rel (0) target = $region17
    $region16: #{tpu_custom_call.1} parent=1 // pred_region
      _
    $region17: #{tpu_custom_call.1} parent=1 // pred_fallthru
      _
    // Predicated region
    $region18: #{tpu_custom_call.1} parent=1 // pred_check
      _
    $region19: #{tpu_custom_call.1} parent=1 // pred_check_branch
      %21 = sbr.rel (0) target = $region21
    $region20: #{tpu_custom_call.1} parent=1 // pred_region
      _
    $region21: #{tpu_custom_call.1} parent=1 // pred_fallthru
      _
    %v22 = vld [vmem:[%s0] sm:$0xff]
    %v23 = vld [vmem:[%s0 + $0x8] sm:$0xff]
    %v24 = vld [vmem:[%s0 + $0x10] sm:$0xff]
    %v25 = vld [vmem:[%s0 + $0x18] sm:$0xff]
    %v26 = vld [vmem:[%s0 + $0x20] sm:$0xff]
    %v27 = vld [vmem:[%s0 + $0x28] sm:$0xff]
    %v28 = vld [vmem:[%s0 + $0x30] sm:$0xff]
    %v29 = vld [vmem:[%s0 + $0x38] sm:$0xff]
    %v30 = vld [vmem:[%s0 + $0x40] sm:$0xff]
    %v31 = vld [vmem:[%s0 + $0x48] sm:$0xff]
    %v32 = vld [vmem:[%s0 + $0x50] sm:$0xff]
    %v33 = vld [vmem:[%s0 + $0x58] sm:$0xff]
    %v34 = vld [vmem:[%s0 + $0x60] sm:$0xff]
    %v35 = vld [vmem:[%s0 + $0x68] sm:$0xff]
    %v36 = vld [vmem:[%s0 + $0x70] sm:$0xff]
    %v37 = vld [vmem:[%s0 + $0x78] sm:$0xff]
    %v38 = vld [vmem:[%s1] sm:$0xff]
    %v39 = vld [vmem:[%s1 + $0x8] sm:$0xff]
    %v40 = vld [vmem:[%s1 + $0x10] sm:$0xff]
    %v41 = vld [vmem:[%s1 + $0x18] sm:$0xff]
    %v42 = vld [vmem:[%s2] sm:$0x1]
    %v44 = vperm.slane %v42, 0
    %vm46 = vcmask 261120
    %v48 = vsel %vm46, %v22, 0
    %v51 = vsel %vm46, %v23, 0
    %v54 = vsel %vm46, %v24, 0
    %v57 = vsel %vm46, %v25, 0
    %v60 = vsel %vm46, %v26, 0
    %v63 = vsel %vm46, %v27, 0
    %v66 = vsel %vm46, %v28, 0
    %v69 = vsel %vm46, %v29, 0
    %v72 = vsel %vm46, %v30, 0
    %v75 = vsel %vm46, %v31, 0
    %v78 = vsel %vm46, %v32, 0
    %v81 = vsel %vm46, %v33, 0
    %v84 = vsel %vm46, %v34, 0
    %v87 = vsel %vm46, %v35, 0
    %v90 = vsel %vm46, %v36, 0
    %v93 = vsel %vm46, %v37, 0
    %95 = vmatpush.msra.mxu0 0.0
    %96 = vmatpush.msra.mxu0 0.0
    %97 = vmatpush.msra.mxu0 0.0
    %98 = vmatpush.msra.mxu0 0.0
    %99 = vmatpush.msra.mxu0 0.0
    %100 = vmatpush.msra.mxu0 0.0
    %101 = vmatpush.msra.mxu0 0.0
    %102 = vmatpush.msra.mxu0 0.0
    %103 = vmatpush.msra.mxu0 0.0
    %104 = vmatpush.msra.mxu0 0.0
    %105 = vmatpush.msra.mxu0 0.0
    %106 = vmatpush.msra.mxu0 0.0
    %107 = vmatpush.msra.mxu0 %v41
    %108 = vmatpush.msra.mxu0 %v40
    %109 = vmatpush.msra.mxu0 %v39
    %110 = vmatpush.msra.mxu0 %v38
    %111 = vmatmul.f32.gmra.mxu0 %v48
    %v112 = vpop.f32.mrf.mxu0
    %v113 = vadd.f32 %v44, %v112
    %114 = vmatmul.f32.gmra.mxu0 %v51
    %v115 = vpop.f32.mrf.mxu0
    %v116 = vadd.f32 %v44, %v115
    %117 = vmatmul.f32.gmra.mxu0 %v54
    %v118 = vpop.f32.mrf.mxu0
    %v119 = vadd.f32 %v44, %v118
    %120 = vmatmul.f32.gmra.mxu0 %v57
    %v121 = vpop.f32.mrf.mxu0
    %v122 = vadd.f32 %v44, %v121
    %123 = vmatmul.f32.gmra.mxu0 %v60
    %v124 = vpop.f32.mrf.mxu0
    %v125 = vadd.f32 %v44, %v124
    %126 = vmatmul.f32.gmra.mxu0 %v63
    %v127 = vpop.f32.mrf.mxu0
    %v128 = vadd.f32 %v44, %v127
    %129 = vmatmul.f32.gmra.mxu0 %v66
    %v130 = vpop.f32.mrf.mxu0
    %v131 = vadd.f32 %v44, %v130
    %132 = vmatmul.f32.gmra.mxu0 %v69
    %v133 = vpop.f32.mrf.mxu0
    %v134 = vadd.f32 %v44, %v133
    %135 = vmatmul.f32.gmra.mxu0 %v72
    %v136 = vpop.f32.mrf.mxu0
    %v137 = vadd.f32 %v44, %v136
    %138 = vmatmul.f32.gmra.mxu0 %v75
    %v139 = vpop.f32.mrf.mxu0
    %v140 = vadd.f32 %v44, %v139
    %141 = vmatmul.f32.gmra.mxu0 %v78
    %v142 = vpop.f32.mrf.mxu0
    %v143 = vadd.f32 %v44, %v142
    %144 = vmatmul.f32.gmra.mxu0 %v81
    %v145 = vpop.f32.mrf.mxu0
    %v146 = vadd.f32 %v44, %v145
    %147 = vmatmul.f32.gmra.mxu0 %v84
    %v148 = vpop.f32.mrf.mxu0
    %v149 = vadd.f32 %v44, %v148
    %150 = vmatmul.f32.gmra.mxu0 %v87
    %v151 = vpop.f32.mrf.mxu0
    %v152 = vadd.f32 %v44, %v151
    %153 = vmatmul.f32.gmra.mxu0 %v90
    %v154 = vpop.f32.mrf.mxu0
    %v155 = vadd.f32 %v44, %v154
    %156 = vmatmul.f32.gmra.mxu0 %v93
    %v157 = vpop.f32.mrf.mxu0
    %v158 = vadd.f32 %v44, %v157
    %159 = vdwg.mxu0
    %v160 = vmax.f32 %v113, 0.0
    %v161 = vmax.f32 %v116, 0.0
    %v162 = vmax.f32 %v119, 0.0
    %v163 = vmax.f32 %v122, 0.0
    %v164 = vmax.f32 %v125, 0.0
    %v165 = vmax.f32 %v128, 0.0
    %v166 = vmax.f32 %v131, 0.0
    %v167 = vmax.f32 %v134, 0.0
    %v168 = vmax.f32 %v137, 0.0
    %v169 = vmax.f32 %v140, 0.0
    %v170 = vmax.f32 %v143, 0.0
    %v171 = vmax.f32 %v146, 0.0
    %v172 = vmax.f32 %v149, 0.0
    %v173 = vmax.f32 %v152, 0.0
    %v174 = vmax.f32 %v155, 0.0
    %v175 = vmax.f32 %v158, 0.0
    %v176 = vld [vmem:[%s3] sm:$0x1]
    %v178 = vperm.slane %v176, 0
    %v180 = vmul.f32 %v160, %v178
    %v181 = vmul.f32 %v161, %v178
    %v182 = vmul.f32 %v162, %v178
    %v183 = vmul.f32 %v163, %v178
    %v184 = vmul.f32 %v164, %v178
    %v185 = vmul.f32 %v165, %v178
    %v186 = vmul.f32 %v166, %v178
    %v187 = vmul.f32 %v167, %v178
    %v188 = vmul.f32 %v168, %v178
    %v189 = vmul.f32 %v169, %v178
    %v190 = vmul.f32 %v170, %v178
    %v191 = vmul.f32 %v171, %v178
    %v192 = vmul.f32 %v172, %v178
    %v193 = vmul.f32 %v173, %v178
    %v194 = vmul.f32 %v174, %v178
    %v195 = vmul.f32 %v175, %v178
    %196 = vadd.xlane.f32.xlu0 %v180
    %v197 = vpop.xlane.xlu0 %196
    %198 = vadd.xlane.f32.xlu0 %v181
    %v199 = vpop.xlane.xlu0 %198
    %200 = vadd.xlane.f32.xlu0 %v182
    %v201 = vpop.xlane.xlu0 %200
    %202 = vadd.xlane.f32.xlu0 %v183
    %v203 = vpop.xlane.xlu0 %202
    %204 = vadd.xlane.f32.xlu0 %v184
    %v205 = vpop.xlane.xlu0 %204
    %206 = vadd.xlane.f32.xlu0 %v185
    %v207 = vpop.xlane.xlu0 %206
    %208 = vadd.xlane.f32.xlu0 %v186
    %v209 = vpop.xlane.xlu0 %208
    %210 = vadd.xlane.f32.xlu0 %v187
    %v211 = vpop.xlane.xlu0 %210
    %212 = vadd.xlane.f32.xlu0 %v188
    %v213 = vpop.xlane.xlu0 %212
    %214 = vadd.xlane.f32.xlu0 %v189
    %v215 = vpop.xlane.xlu0 %214
    %216 = vadd.xlane.f32.xlu0 %v190
    %v217 = vpop.xlane.xlu0 %216
    %218 = vadd.xlane.f32.xlu0 %v191
    %v219 = vpop.xlane.xlu0 %218
    %220 = vadd.xlane.f32.xlu0 %v192
    %v221 = vpop.xlane.xlu0 %220
    %222 = vadd.xlane.f32.xlu0 %v193
    %v223 = vpop.xlane.xlu0 %222
    %224 = vadd.xlane.f32.xlu0 %v194
    %v225 = vpop.xlane.xlu0 %224
    %226 = vadd.xlane.f32.xlu0 %v195
    %v227 = vpop.xlane.xlu0 %226
    %s228 = sld [smem:[#allocation2]]
    %v229 = vstv %s228
    %v230 = vadd.f32 %v197, %v229
    %v231 = vadd.f32 %v199, %v229
    %v232 = vadd.f32 %v201, %v229
    %v233 = vadd.f32 %v203, %v229
    %v234 = vadd.f32 %v205, %v229
    %v235 = vadd.f32 %v207, %v229
    %v236 = vadd.f32 %v209, %v229
    %v237 = vadd.f32 %v211, %v229
    %v238 = vadd.f32 %v213, %v229
    %v239 = vadd.f32 %v215, %v229
    %v240 = vadd.f32 %v217, %v229
    %v241 = vadd.f32 %v219, %v229
    %v242 = vadd.f32 %v221, %v229
    %v243 = vadd.f32 %v223, %v229
    %v244 = vadd.f32 %v225, %v229
    %v245 = vadd.f32 %v227, %v229
    %v262 = vlaneseq
    %v263 = vand.u32 %v262, 127
    %v264 = vperm.slane %v230, %v263
    %v265 = vadd.s32 %v263, 4294967288
    %v266 = vperm.slane %v231, %v265
    %vm267 = vcmask 130112
    %v268 = vsel %vm267, %v266, %v264
    %v269 = vadd.s32 %v263, 4294967280
    %v270 = vperm.slane %v232, %v269
    %vm271 = vcmask 195712
    %v272 = vsel %vm271, %v270, %v268
    %v273 = vadd.s32 %v263, 4294967272
    %v274 = vperm.slane %v233, %v273
    %vm275 = vcmask 261312
    %v276 = vsel %vm275, %v274, %v272
    %v277 = vadd.s32 %v263, 4294967264
    %v278 = vperm.slane %v234, %v277
    %vm279 = vcmask 326912
    %v280 = vsel %vm279, %v278, %v276
    %v281 = vadd.s32 %v263, 4294967256
    %v282 = vperm.slane %v235, %v281
    %vm283 = vcmask 392512
    %v284 = vsel %vm283, %v282, %v280
    %v285 = vadd.s32 %v263, 4294967248
    %v286 = vperm.slane %v236, %v285
    %vm287 = vcmask 458112
    %v288 = vsel %vm287, %v286, %v284
    %v289 = vadd.s32 %v263, 4294967240
    %v290 = vperm.slane %v237, %v289
    %vm291 = vcmask 523712
    %v292 = vsel %vm291, %v290, %v288
    %v293 = vadd.s32 %v263, 4294967232
    %v294 = vperm.slane %v238, %v293
    %vm295 = vcmask 589312
    %v296 = vsel %vm295, %v294, %v292
    %v297 = vadd.s32 %v263, 4294967224
    %v298 = vperm.slane %v239, %v297
    %vm299 = vcmask 654912
    %v300 = vsel %vm299, %v298, %v296
    %v301 = vadd.s32 %v263, 4294967216
    %v302 = vperm.slane %v240, %v301
    %vm303 = vcmask 720512
    %v304 = vsel %vm303, %v302, %v300
    %v305 = vadd.s32 %v263, 4294967208
    %v306 = vperm.slane %v241, %v305
    %vm307 = vcmask 786112
    %v308 = vsel %vm307, %v306, %v304
    %v309 = vadd.s32 %v263, 4294967200
    %v310 = vperm.slane %v242, %v309
    %vm311 = vcmask 851712
    %v312 = vsel %vm311, %v310, %v308
    %v313 = vadd.s32 %v263, 4294967192
    %v314 = vperm.slane %v243, %v313
    %vm315 = vcmask 917312
    %v316 = vsel %vm315, %v314, %v312
    %v317 = vadd.s32 %v263, 4294967184
    %v318 = vperm.slane %v244, %v317
    %vm319 = vcmask 982912
    %v320 = vsel %vm319, %v318, %v316
    %v321 = vadd.s32 %v263, 4294967176
    %v322 = vperm.slane %v245, %v321
    %vm323 = vcmask 1048512
    %v324 = vsel %vm323, %v322, %v320
    %326 = vst [vmem:[#allocation3] sm:$0x1] %v324
    // Predicated region
    $region22: #{tpu_custom_call.1} parent=1 // pred_check
      _
    $region23: #{tpu_custom_call.1} parent=1 // pred_check_branch
      %328 = sbr.rel (0) target = $region25
    $region24: #{tpu_custom_call.1} parent=1 // pred_region
      %330 = vsyncadd [#allocation4], 0
      %s332 = sshll.u32 [#allocation3], 4
      %s333 = int_to_ptr.vmem [resolvable:$true] %s332
      %s334 = sshll.u32 %s5, 4
      %s335 = int_to_ptr.hbm [resolvable:$true] %s334
      %337 = dma.vmem_to_hbm [thread:$0]  %s333, 16, %s335, [#allocation4]
    $region25: #{tpu_custom_call.1} parent=1 // pred_fallthru
      _
    // Predicated region
    $region26: #{tpu_custom_call.1} parent=1 // pred_check
      _
    $region27: #{tpu_custom_call.1} parent=1 // pred_check_branch
      %339 = sbr.rel (0) target = $region29
    $region28: #{tpu_custom_call.1} parent=1 // pred_region
      %341 = dma.done [#allocation4], 16
    $region29: #{tpu_custom_call.1} parent=1 // pred_fallthru
      _
    %342 = vsyncpa [#allocation4], 1

</llo_original>
